<compile_context>
chip_gen: v6e
topology: v6e:2x2x1
jax: 0.10.0
libtpu: 0.0.40
codegen_flags: <defaults>
</compile_context>

<pallas_src>
import jax
import jax.numpy as jnp
from jax.experimental import pallas as pl
from jax.experimental.pallas import tpu as pltpu

_LANES = 128
_MIB = 1024 * 1024


def _daf_add_kernel(x_ref, r_ref, o_ref):
    # Elementwise add on the current VMEM tile (2-D (tile, 128) or 1-D slab).
    o_ref[...] = x_ref[...] + r_ref[...]


def _chip_generation():
    """Best-effort TPU generation (4/5/6/7) from device_kind; 0 if unknown."""
    try:
        kind = jax.devices()[0].device_kind.lower()
    except Exception:
        return 0
    for gen in (7, 6, 5, 4):
        if f"v{gen}" in kind:
            return gen
    return 0


def _round_up(x, m):
    return ((x + m - 1) // m) * m


def _pick_tile(rows128, itemsize, tile_rows=None):
    """Choose the block height (in 128-lane rows) for the streaming add."""
    gen = _chip_generation()
    # ~2 MiB per buffer hits the measured HBM-roofline plateau on v5e/v6e;
    # v7x (~3.2 TB/s) wants ~4 MiB so DMA time stays well above step overhead.
    target_bytes = 4 * _MIB if gen >= 7 else 2 * _MIB
    # Keep enough grid steps for prefetch/writeback overlap (and 2 TCs on v7x).
    min_steps = 8 if gen >= 7 else 4
    # Dtype-aware sublane multiple: f32 -> 8, bf16/f16 -> 16, int8/fp8 -> 32.
    sub = {4: 8, 2: 16, 1: 32}.get(itemsize, 8)

    if tile_rows is None:
        tile_rows = target_bytes // (_LANES * itemsize)
    tile_rows = max(sub, (tile_rows // sub) * sub)

    cap = _round_up(pl.cdiv(rows128, min_steps), sub)
    return max(sub, min(tile_rows, cap))


def _pallas_add(x_arr, r_arr, block_shape, grid, alias_x_output, vmem_limit_bytes):
    """One pallas_call over a lane-dense 2-D slab or a flat 1-D array."""
    if len(block_shape) == 2:
        index_map = lambda i: (i, 0)
    else:
        index_map = lambda i: (i,)
    spec = pl.BlockSpec(block_shape, index_map)

    cp_kwargs = dict(dimension_semantics=("parallel",))
    if vmem_limit_bytes is not None:
        cp_kwargs["vmem_limit_bytes"] = vmem_limit_bytes

    extra = {}
    if alias_x_output:
        # Output reuses x's HBM buffer (only a win if x is donated / dead).
        extra["input_output_aliases"] = {0: 0}

    return pl.pallas_call(
        _daf_add_kernel,
        out_shape=jax.ShapeDtypeStruct(x_arr.shape, x_arr.dtype),
        grid_spec=pltpu.PrefetchScalarGridSpec(
            num_scalar_prefetch=0,
            grid=grid,
            in_specs=[spec, spec],
            out_specs=spec,
        ),
        compiler_params=pltpu.CompilerParams(**cp_kwargs),
        **extra,
    )(x_arr, r_arr)


def daf_forward(x, residual, *, tile_rows=None, vmem_limit_bytes=None,
                fallback_bytes=256 * 1024, alias_x_output=False):
    """DAF.forward(x, residual) = x + residual, computed in a Pallas kernel."""
    assert x.shape == residual.shape, "x and residual must have the same shape"
    assert x.dtype == residual.dtype, "x and residual must have the same dtype"

    orig_shape = x.shape
    total = x.size
    itemsize = jnp.dtype(x.dtype).itemsize

    # Small activations: a standalone kernel's launch + extra HBM round trip
    # dwarfs an XLA add (which can fuse into the producer's epilogue).
    if total * itemsize < fallback_bytes or total < _LANES:
        return x + residual

    rows128 = pl.cdiv(total, _LANES)  # number of 128-lane rows (last may be partial)
    tile = _pick_tile(rows128, itemsize, tile_rows)

    if total % _LANES == 0:
        # Common case: pure reshape (no data movement) to a lane-dense slab.
        x2 = x.reshape(rows128, _LANES)
        r2 = residual.reshape(rows128, _LANES)
        out2 = _pallas_add(
            x2, r2,
            block_shape=(tile, _LANES),
            grid=(pl.cdiv(rows128, tile),),
            alias_x_output=alias_x_output,
            vmem_limit_bytes=vmem_limit_bytes,
        )
        return out2.reshape(orig_shape)

    # Ragged total: run the same kernel over the flat 1-D arrays. The block is a
    # multiple of 8*128 elements; Pallas masks the partial final block, so there
    # are no prefix-slice / concatenate HBM copies.
    block_elems = tile * _LANES
    xf = x.reshape(-1)
    rf = residual.reshape(-1)
    outf = _pallas_add(
        xf, rf,
        block_shape=(block_elems,),
        grid=(pl.cdiv(total, block_elems),),
        alias_x_output=alias_x_output,
        vmem_limit_bytes=vmem_limit_bytes,
    )
    return outf.reshape(orig_shape)


if __name__ == "__main__":
    # DAF has no parameters (empty __init__), so nothing to initialize.
    key = jax.random.PRNGKey(0)

    cases = [
        ((2, 4, 16, 16), jnp.float32),    # tiny -> XLA fallback path
        ((2, 32, 56, 56), jnp.float32),   # aligned (total % 128 == 0) -> 2-D Pallas path
        ((7, 13, 65, 37), jnp.float32),   # ragged total -> 1-D Pallas path (masked tail)
        ((2, 64, 56, 56), jnp.bfloat16),  # aligned bf16 -> 16-row sublane tiles
    ]

    for i, (shape, dtype) in enumerate(cases):
        kx, kr = jax.random.split(jax.random.fold_in(key, i))
        x = jax.random.normal(kx, shape, dtype=jnp.float32).astype(dtype)
        residual = jax.random.normal(kr, shape, dtype=jnp.float32).astype(dtype)

        out = jax.block_until_ready(daf_forward(x, residual))

        ref = x + residual
        assert out.shape == ref.shape and out.dtype == ref.dtype
        tol = 1e-6 if dtype == jnp.float32 else 2e-2
        ok = jnp.allclose(out.astype(jnp.float32), ref.astype(jnp.float32),
                          atol=tol, rtol=tol)
        assert ok, f"mismatch for case {i}: shape={shape} dtype={dtype}"

    print("KERNEL_OK")
</pallas_src>

<mosaic_0001>
module attributes {stable_mosaic.version = 11 : i64} {
  func.func @_daf_add_kernel(%arg0: i32, %arg1: memref<392x128xf32, #tpu.memory_space<vmem>>, %arg2: memref<392x128xf32, #tpu.memory_space<vmem>>, %arg3: memref<392x128xf32, #tpu.memory_space<vmem>>) attributes {dimension_semantics = [#tpu.dimension_semantics<parallel>], iteration_bounds = array<i64: 4>, scalar_prefetch = 0 : i64, scratch_operands = 0 : i64, tpu.core_type = #tpu.core_type<tc>, window_params = [{transform_indices = @transform_0, window_bounds = array<i64: 392, 128>}, {transform_indices = @transform_1, window_bounds = array<i64: 392, 128>}, {transform_indices = @transform_2, window_bounds = array<i64: 392, 128>}]} {
    %c0 = arith.constant 0 : index
    %c0_0 = arith.constant 0 : index
    %0 = vector.load %arg1[%c0, %c0_0] : memref<392x128xf32, #tpu.memory_space<vmem>>, vector<392x128xf32>
    %c0_1 = arith.constant 0 : index
    %c0_2 = arith.constant 0 : index
    %1 = vector.load %arg2[%c0_1, %c0_2] : memref<392x128xf32, #tpu.memory_space<vmem>>, vector<392x128xf32>
    %2 = arith.addf %0, %1 : vector<392x128xf32>
    %c0_3 = arith.constant 0 : index
    %c0_4 = arith.constant 0 : index
    %3 = vector.load %arg3[%c0_3, %c0_4] : memref<392x128xf32, #tpu.memory_space<vmem>>, vector<392x128xf32>
    tpu.vector_store %arg3[%c0_3, %c0_4], %2 {strides = array<i32>} : memref<392x128xf32, #tpu.memory_space<vmem>>, vector<392x128xf32>,
    return
  }
  func.func @transform_0(%arg0: i32) -> (i32, i32) {
    %c0_i32 = arith.constant 0 : i32
    %c0_i32_0 = arith.constant 0 : i32
    return %arg0, %c0_i32 : i32, i32
  }
  func.func @transform_1(%arg0: i32) -> (i32, i32) {
    %c0_i32 = arith.constant 0 : i32
    %c0_i32_0 = arith.constant 0 : i32
    return %arg0, %c0_i32 : i32, i32
  }
  func.func @transform_2(%arg0: i32) -> (i32, i32) {
    %c0_i32 = arith.constant 0 : i32
    %c0_i32_0 = arith.constant 0 : i32
    return %arg0, %c0_i32 : i32, i32
  }
}

</mosaic_0001>

<llo_original>
// kernel: tpu_custom_call.1
$region0: #{tpu_custom_call.1}
  #allocation0 [shape = 'u32[]', space=smem, size = 0x4, offset = 0x4, fixed_abs, tag = 'smem constant byte address 0x4 - core index']
  #allocation1 [shape = 'u32[144,128]{1,0:T(1,128)}', space=vmem, size = 0x12000, scoped, tag = 'internal scratch']
  %s0 = inlined_call_operand.hbm [shape: f32[1568,128], index: 0, kind: input, shape index: {}]
  %s1 = inlined_call_operand.hbm [shape: f32[1568,128], index: 1, kind: input, shape index: {}]
  %s2 = inlined_call_operand.hbm [shape: f32[1568,128], index: 2, kind: output, shape index: {}]
  %s3 = sld [smem:[#allocation0]]
  $region49: #{tpu_custom_call.1} parent=0
    _
  %s5 = ssub.s32 1, %s3
  %s6 = scalar_select 0, %s5, %s3
  $region1: #{tpu_custom_call.1} parent=0
    #allocation2 [shape = 'u8[401408]{0}', space=vmem, size = 0x62000, scoped, tag = 'input window, operand 0']
    #allocation3 [shape = 's32[2]{0}', space=sflag, size = 0x8, scoped, tag = 'scoped memory for tpu_custom_call.1']
    #allocation4 [shape = 's32[2]{0}', space=sflag, size = 0x8, scoped, tag = 'scoped memory for tpu_custom_call.1']
    #allocation5 [shape = 'u8[401408]{0}', space=vmem, size = 0x62000, scoped, tag = 'input window, operand 1']
    #allocation6 [shape = 's32[2]{0}', space=sflag, size = 0x8, scoped, tag = 'scoped memory for tpu_custom_call.1']
    #allocation7 [shape = 'u8[401408]{0}', space=vmem, size = 0x62000, scoped, tag = 'output window, operand 0']
    %7 = vsyncpa [#allocation3], 0
    %s8 = scalar_lea.sflag [#allocation3], 1
    %9 = vsyncpa %s8, 0
    %10 = vsyncpa [#allocation6], 0
    %s11 = scalar_lea.sflag [#allocation6], 1
    %12 = vsyncpa %s11, 0
    %13 = vsyncpa [#allocation4], 0
    %s14 = scalar_lea.sflag [#allocation4], 1
    %15 = vsyncpa %s14, 0
    loop: start=0, step=1, limit=6
    $region2: #{tpu_custom_call.1} parent=1 // loop_pre_header
      _
    $region3: #{tpu_custom_call.1} parent=1 // loop_header
      %s17 = sphi 0, %s21
      %p18 = scmp.ge.s32.totalorder %s17, 6
      %s27 = sphi 0, %s29
      %s30 = sphi 0, %s27
      %s31 = sphi 0, %s30
      %s47 = sphi 0, %s31
      %s53 = sphi 0, %s55
      %s56 = sphi 0, %s53
      %s57 = sphi 0, %s56
      %s73 = sphi 0, %s57
      %s79 = sphi 0, %s81
      %s82 = sphi 0, %s79
      %s83 = sphi 0, %s82
      %s99 = sphi 0, %s83
    $region4: #{tpu_custom_call.1} parent=1 // loop_header_branch
      %20 = sbr.rel (%p18) target = $region8
    $region5: #{tpu_custom_call.1} parent=1 // loop_body
      %s22 = ssub.s32 %s17, 1
      %s23 = ssub.s32 %s17, 2
      %s24 = sadd.s32 %s17, 1
      %s25 = ssub.s32 %s17, %s24
      %p26 = scmp.eq.s32.totalorder %s25, 0
      %s28 = sadd.s32 %s27, 1
      %s29 = scalar_select %p26, %s27, %s28
      %p32 = pneg %p26
      %p33 = scmp.eq.s32.totalorder %s17, 3
      %p34 = por %p32, %p33
      %p35 = scmp.ne.s32.totalorder %s27, %s30
      %p36 = scmp.eq.s32.totalorder %s17, 0
      %p37 = por %p35, %p36
      %p38 = scmp.ne.s32.totalorder %s27, %s30
      %p39 = scmp.eq.s32.totalorder %s22, 3
      %p40 = por %p38, %p39
      %p41 = scmp.ne.s32.totalorder %s30, %s31
      %p42 = scmp.eq.s32.totalorder %s22, 0
      %p43 = por %p41, %p42
      %p44 = scmp.ne.s32.totalorder %s30, %s31
      %p45 = scmp.eq.s32.totalorder %s23, 3
      %p46 = por %p44, %p45
      %p48 = scmp.ne.s32.totalorder %s31, %s47
      %p49 = scmp.eq.s32.totalorder %s23, 0
      %p50 = por %p48, %p49
      %s51 = ssub.s32 %s17, %s24
      %p52 = scmp.eq.s32.totalorder %s51, 0
      %s54 = sadd.s32 %s53, 1
      %s55 = scalar_select %p52, %s53, %s54
      %p58 = pneg %p52
      %p59 = scmp.eq.s32.totalorder %s17, 3
      %p60 = por %p58, %p59
      %p61 = scmp.ne.s32.totalorder %s53, %s56
      %p62 = scmp.eq.s32.totalorder %s17, 0
      %p63 = por %p61, %p62
      %p64 = scmp.ne.s32.totalorder %s53, %s56
      %p65 = scmp.eq.s32.totalorder %s22, 3
      %p66 = por %p64, %p65
      %p67 = scmp.ne.s32.totalorder %s56, %s57
      %p68 = scmp.eq.s32.totalorder %s22, 0
      %p69 = por %p67, %p68
      %p70 = scmp.ne.s32.totalorder %s56, %s57
      %p71 = scmp.eq.s32.totalorder %s23, 3
      %p72 = por %p70, %p71
      %p74 = scmp.ne.s32.totalorder %s57, %s73
      %p75 = scmp.eq.s32.totalorder %s23, 0
      %p76 = por %p74, %p75
      %s77 = ssub.s32 %s17, %s24
      %p78 = scmp.eq.s32.totalorder %s77, 0
      %s80 = sadd.s32 %s79, 1
      %s81 = scalar_select %p78, %s79, %s80
      %p84 = pneg %p78
      %p85 = scmp.eq.s32.totalorder %s17, 3
      %p86 = por %p84, %p85
      %p87 = scmp.ne.s32.totalorder %s79, %s82
      %p88 = scmp.eq.s32.totalorder %s17, 0
      %p89 = por %p87, %p88
      %p90 = scmp.ne.s32.totalorder %s79, %s82
      %p91 = scmp.eq.s32.totalorder %s22, 3
      %p92 = por %p90, %p91
      %p93 = scmp.ne.s32.totalorder %s82, %s83
      %p94 = scmp.eq.s32.totalorder %s22, 0
      %p95 = por %p93, %p94
      %p96 = scmp.ne.s32.totalorder %s82, %s83
      %p97 = scmp.eq.s32.totalorder %s23, 3
      %p98 = por %p96, %p97
      %p100 = scmp.ne.s32.totalorder %s83, %s99
      %p101 = scmp.eq.s32.totalorder %s23, 0
      %p102 = por %p100, %p101
      %p103 = scmp.le.s32.totalorder 1, %s17
      %p104 = scmp.lt.s32.totalorder %s17, 5
      %p105 = pnand %p103, %p104
      %p106 = pneg %p105
      // Predicated region
      $region9: #{tpu_custom_call.1} parent=5 // pred_check
        _
      $region10: #{tpu_custom_call.1} parent=5 // pred_check_branch
        %108 = sbr.rel (%p105) target = $region12
      $region11: #{tpu_custom_call.1} parent=5 // pred_region
        %s109 = ssub.s32 %s17, 1
      $region12: #{tpu_custom_call.1} parent=5 // pred_fallthru
        _
      %p110 = scmp.lt.s32.totalorder %s17, 4
      // Predicated region
      $region13: #{tpu_custom_call.1} parent=5 // pred_check
        %p111 = pneg %p110
      $region14: #{tpu_custom_call.1} parent=5 // pred_check_branch
        %113 = sbr.rel (%p111) target = $region16
      $region15: #{tpu_custom_call.1} parent=5 // pred_region
        // Predicated region
        $region17: #{tpu_custom_call.1} parent=15 // pred_check
          %p114 = pneg %p37
        $region18: #{tpu_custom_call.1} parent=15 // pred_check_branch
          %116 = sbr.rel (%p114) target = $region20
        $region19: #{tpu_custom_call.1} parent=15 // pred_region
          %s117 = sand.u32 %s27, 1
          %s118 = scalar_lea.sflag [#allocation3], %s117
          %s119 = sand.u32 %s27, 1
          %s120 = smul.addr %s119, 392
          %s121 = scalar_lea.vmem [#allocation2], %s120
          %s122 = smul.u32 49, %s17
          %s124 = ssub.s32 6272, 6272
          %125 = vsyncadd %s118, %s124
          %s126 = smul.addr %s122, 128
          %s127 = scalar_lea.hbm %s0, %s126
          %s128 = sshll.u32 %s121, 4
          %s129 = int_to_ptr.vmem [resolvable:$true] %s128
          %134 = dma.hbm_to_vmem [thread:$0]  %s127, 6272, %s129, %s118, 128, 128, 8
        $region20: #{tpu_custom_call.1} parent=15 // pred_fallthru
          _
        // Predicated region
        $region21: #{tpu_custom_call.1} parent=15 // pred_check
          %p135 = pneg %p63
        $region22: #{tpu_custom_call.1} parent=15 // pred_check_branch
          %137 = sbr.rel (%p135) target = $region24
        $region23: #{tpu_custom_call.1} parent=15 // pred_region
          %s138 = sand.u32 %s53, 1
          %s139 = scalar_lea.sflag [#allocation6], %s138
          %s140 = sand.u32 %s53, 1
          %s141 = smul.addr %s140, 392
          %s142 = scalar_lea.vmem [#allocation5], %s141
          %s143 = smul.u32 49, %s17
          %s145 = ssub.s32 6272, 6272
          %146 = vsyncadd %s139, %s145
          %s147 = smul.addr %s143, 128
          %s148 = scalar_lea.hbm %s1, %s147
          %s149 = sshll.u32 %s142, 4
          %s150 = int_to_ptr.vmem [resolvable:$true] %s149
          %155 = dma.hbm_to_vmem [thread:$0]  %s148, 6272, %s150, %s139, 128, 128, 8
        $region24: #{tpu_custom_call.1} parent=15 // pred_fallthru
          _
      $region16: #{tpu_custom_call.1} parent=5 // pred_fallthru
        _
      %p156 = scmp.le.s32.totalorder 1, %s17
      %p157 = scmp.lt.s32.totalorder %s17, 5
      %p158 = pnand %p156, %p157
      %p159 = pneg %p158
      // Predicated region
      $region25: #{tpu_custom_call.1} parent=5 // pred_check
        _
      $region26: #{tpu_custom_call.1} parent=5 // pred_check_branch
        %161 = sbr.rel (%p158) target = $region28
      $region27: #{tpu_custom_call.1} parent=5 // pred_region
        %s162 = ssub.s32 %s17, 1
        %s163 = sand.u32 %s30, 1
        %s164 = scalar_lea.sflag [#allocation3], %s163
        %s165 = sand.u32 %s30, 1
        %s166 = smul.addr %s165, 392
        %s167 = scalar_lea.vmem [#allocation2], %s166
        // Predicated region
        $region29: #{tpu_custom_call.1} parent=27 // pred_check
          %p168 = pneg %p43
        $region30: #{tpu_custom_call.1} parent=27 // pred_check_branch
          %170 = sbr.rel (%p168) target = $region32
        $region31: #{tpu_custom_call.1} parent=27 // pred_region
          %171 = dma.done %s164, 6272
        $region32: #{tpu_custom_call.1} parent=27 // pred_fallthru
          _
        %s172 = sand.u32 %s56, 1
        %s173 = scalar_lea.sflag [#allocation6], %s172
        %s174 = sand.u32 %s56, 1
        %s175 = smul.addr %s174, 392
        %s176 = scalar_lea.vmem [#allocation5], %s175
        // Predicated region
        $region33: #{tpu_custom_call.1} parent=27 // pred_check
          %p177 = pneg %p69
        $region34: #{tpu_custom_call.1} parent=27 // pred_check_branch
          %179 = sbr.rel (%p177) target = $region36
        $region35: #{tpu_custom_call.1} parent=27 // pred_region
          %180 = dma.done %s173, 6272
        $region36: #{tpu_custom_call.1} parent=27 // pred_fallthru
          _
        %s181 = sand.u32 %s30, 1
        %s182 = scalar_lea.sflag [#allocation3], %s181
        %s183 = sand.u32 %s30, 1
        %s184 = smul.addr %s183, 392
        %s185 = scalar_lea.vmem [#allocation2], %s184
        %p186 = pneg %p43
        %p187 = pneg %p40
        %s188 = sand.u32 %s56, 1
        %s189 = scalar_lea.sflag [#allocation6], %s188
        %s190 = sand.u32 %s56, 1
        %s191 = smul.addr %s190, 392
        %s192 = scalar_lea.vmem [#allocation5], %s191
        %p193 = pneg %p69
        %p194 = pneg %p66
        %p195 = pneg %p95
        %p196 = pneg %p92
        %s197 = sand.u32 %s82, 1
        %s198 = scalar_lea.sflag [#allocation4], %s197
        %s199 = sand.u32 %s82, 1
        %s200 = smul.addr %s199, 392
        %s201 = scalar_lea.vmem [#allocation7], %s200
        %s202 = smul.u32 49, %s22
        %s203 = smul.u32 49, %s22
        %s204 = smul.u32 49, %s22
        %v205 = vld [vmem:[%s167] sm:$0xff]
        %v206 = vld [vmem:[%s167 + $0x8] sm:$0xff]
        %v207 = vld [vmem:[%s167 + $0x10] sm:$0xff]
        %v208 = vld [vmem:[%s167 + $0x18] sm:$0xff]
        %v209 = vld [vmem:[%s167 + $0x20] sm:$0xff]
        %v210 = vld [vmem:[%s167 + $0x28] sm:$0xff]
        %v211 = vld [vmem:[%s167 + $0x30] sm:$0xff]
        %v212 = vld [vmem:[%s167 + $0x38] sm:$0xff]
        %v213 = vld [vmem:[%s167 + $0x40] sm:$0xff]
        %v214 = vld [vmem:[%s167 + $0x48] sm:$0xff]
        %v215 = vld [vmem:[%s167 + $0x50] sm:$0xff]
        %v216 = vld [vmem:[%s167 + $0x58] sm:$0xff]
        %v217 = vld [vmem:[%s167 + $0x60] sm:$0xff]
        %v218 = vld [vmem:[%s167 + $0x68] sm:$0xff]
        %v219 = vld [vmem:[%s167 + $0x70] sm:$0xff]
        %v220 = vld [vmem:[%s167 + $0x78] sm:$0xff]
        %v221 = vld [vmem:[%s167 + $0x80] sm:$0xff]
        %v222 = vld [vmem:[%s167 + $0x88] sm:$0xff]
        %v223 = vld [vmem:[%s167 + $0x90] sm:$0xff]
        %v224 = vld [vmem:[%s167 + $0x98] sm:$0xff]
        %v225 = vld [vmem:[%s167 + $0xa0] sm:$0xff]
        %v226 = vld [vmem:[%s167 + $0xa8] sm:$0xff]
        %v227 = vld [vmem:[%s167 + $0xb0] sm:$0xff]
        %v228 = vld [vmem:[%s167 + $0xb8] sm:$0xff]
        %v229 = vld [vmem:[%s167 + $0xc0] sm:$0xff]
        %v230 = vld [vmem:[%s167 + $0xc8] sm:$0xff]
        %v231 = vld [vmem:[%s167 + $0xd0] sm:$0xff]
        %v232 = vld [vmem:[%s167 + $0xd8] sm:$0xff]
        %v233 = vld [vmem:[%s167 + $0xe0] sm:$0xff]
        %v234 = vld [vmem:[%s167 + $0xe8] sm:$0xff]
        %v235 = vld [vmem:[%s167 + $0xf0] sm:$0xff]
        %v236 = vld [vmem:[%s167 + $0xf8] sm:$0xff]
        %v237 = vld [vmem:[%s167 + $0x100] sm:$0xff]
        %v238 = vld [vmem:[%s167 + $0x108] sm:$0xff]
        %v239 = vld [vmem:[%s167 + $0x110] sm:$0xff]
        %v240 = vld [vmem:[%s167 + $0x118] sm:$0xff]
        %v241 = vld [vmem:[%s167 + $0x120] sm:$0xff]
        %v242 = vld [vmem:[%s167 + $0x128] sm:$0xff]
        %v243 = vld [vmem:[%s167 + $0x130] sm:$0xff]
        %v244 = vld [vmem:[%s167 + $0x138] sm:$0xff]
        %v245 = vld [vmem:[%s167 + $0x140] sm:$0xff]
        %v246 = vld [vmem:[%s167 + $0x148] sm:$0xff]
        %v247 = vld [vmem:[%s167 + $0x150] sm:$0xff]
        %v248 = vld [vmem:[%s167 + $0x158] sm:$0xff]
        %v249 = vld [vmem:[%s167 + $0x160] sm:$0xff]
        %v250 = vld [vmem:[%s167 + $0x168] sm:$0xff]
        %v251 = vld [vmem:[%s167 + $0x170] sm:$0xff]
        %v252 = vld [vmem:[%s167 + $0x178] sm:$0xff]
        %v253 = vld [vmem:[%s167 + $0x180] sm:$0xff]
        %v254 = vld [vmem:[%s176] sm:$0xff]
        %v255 = vld [vmem:[%s176 + $0x8] sm:$0xff]
        %v256 = vld [vmem:[%s176 + $0x10] sm:$0xff]
        %v257 = vld [vmem:[%s176 + $0x18] sm:$0xff]
        %v258 = vld [vmem:[%s176 + $0x20] sm:$0xff]
        %v259 = vld [vmem:[%s176 + $0x28] sm:$0xff]
        %v260 = vld [vmem:[%s176 + $0x30] sm:$0xff]
        %v261 = vld [vmem:[%s176 + $0x38] sm:$0xff]
        %v262 = vld [vmem:[%s176 + $0x40] sm:$0xff]
        %v263 = vld [vmem:[%s176 + $0x48] sm:$0xff]
        %v264 = vld [vmem:[%s176 + $0x50] sm:$0xff]
        %v265 = vld [vmem:[%s176 + $0x58] sm:$0xff]
        %v266 = vld [vmem:[%s176 + $0x60] sm:$0xff]
        %v267 = vld [vmem:[%s176 + $0x68] sm:$0xff]
        %v268 = vld [vmem:[%s176 + $0x70] sm:$0xff]
        %v269 = vld [vmem:[%s176 + $0x78] sm:$0xff]
        %v270 = vld [vmem:[%s176 + $0x80] sm:$0xff]
        %v271 = vld [vmem:[%s176 + $0x88] sm:$0xff]
        %v272 = vld [vmem:[%s176 + $0x90] sm:$0xff]
        %v273 = vld [vmem:[%s176 + $0x98] sm:$0xff]
        %v274 = vld [vmem:[%s176 + $0xa0] sm:$0xff]
        %v275 = vld [vmem:[%s176 + $0xa8] sm:$0xff]
        %v276 = vld [vmem:[%s176 + $0xb0] sm:$0xff]
        %v277 = vld [vmem:[%s176 + $0xb8] sm:$0xff]
        %v278 = vld [vmem:[%s176 + $0xc0] sm:$0xff]
        %v279 = vld [vmem:[%s176 + $0xc8] sm:$0xff]
        %v280 = vld [vmem:[%s176 + $0xd0] sm:$0xff]
        %v281 = vld [vmem:[%s176 + $0xd8] sm:$0xff]
        %v282 = vld [vmem:[%s176 + $0xe0] sm:$0xff]
        %v283 = vld [vmem:[%s176 + $0xe8] sm:$0xff]
        %v284 = vld [vmem:[%s176 + $0xf0] sm:$0xff]
        %v285 = vld [vmem:[%s176 + $0xf8] sm:$0xff]
        %v286 = vld [vmem:[%s176 + $0x100] sm:$0xff]
        %v287 = vld [vmem:[%s176 + $0x108] sm:$0xff]
        %v288 = vld [vmem:[%s176 + $0x110] sm:$0xff]
        %v289 = vld [vmem:[%s176 + $0x118] sm:$0xff]
        %v290 = vld [vmem:[%s176 + $0x120] sm:$0xff]
        %v291 = vld [vmem:[%s176 + $0x128] sm:$0xff]
        %v292 = vld [vmem:[%s176 + $0x130] sm:$0xff]
        %v293 = vld [vmem:[%s176 + $0x138] sm:$0xff]
        %v294 = vld [vmem:[%s176 + $0x140] sm:$0xff]
        %v295 = vld [vmem:[%s176 + $0x148] sm:$0xff]
        %v296 = vld [vmem:[%s176 + $0x150] sm:$0xff]
        %v297 = vld [vmem:[%s176 + $0x158] sm:$0xff]
        %v298 = vld [vmem:[%s176 + $0x160] sm:$0xff]
        %v299 = vld [vmem:[%s176 + $0x168] sm:$0xff]
        %v300 = vld [vmem:[%s176 + $0x170] sm:$0xff]
        %v301 = vld [vmem:[%s176 + $0x178] sm:$0xff]
        %v302 = vld [vmem:[%s176 + $0x180] sm:$0xff]
        %v303 = vadd.f32 %v205, %v254
        %v304 = vadd.f32 %v206, %v255
        %v305 = vadd.f32 %v207, %v256
        %v306 = vadd.f32 %v208, %v257
        %v307 = vadd.f32 %v209, %v258
        %v308 = vadd.f32 %v210, %v259
        %v309 = vadd.f32 %v211, %v260
        %v310 = vadd.f32 %v212, %v261
        %v311 = vadd.f32 %v213, %v262
        %v312 = vadd.f32 %v214, %v263
        %v313 = vadd.f32 %v215, %v264
        %v314 = vadd.f32 %v216, %v265
        %v315 = vadd.f32 %v217, %v266
        %v316 = vadd.f32 %v218, %v267
        %v317 = vadd.f32 %v219, %v268
        %v318 = vadd.f32 %v220, %v269
        %v319 = vadd.f32 %v221, %v270
        %v320 = vadd.f32 %v222, %v271
        %v321 = vadd.f32 %v223, %v272
        %v322 = vadd.f32 %v224, %v273
        %v323 = vadd.f32 %v225, %v274
        %v324 = vadd.f32 %v226, %v275
        %v325 = vadd.f32 %v227, %v276
        %v326 = vadd.f32 %v228, %v277
        %v327 = vadd.f32 %v229, %v278
        %v328 = vadd.f32 %v230, %v279
        %v329 = vadd.f32 %v231, %v280
        %v330 = vadd.f32 %v232, %v281
        %v331 = vadd.f32 %v233, %v282
        %v332 = vadd.f32 %v234, %v283
        %v333 = vadd.f32 %v235, %v284
        %v334 = vadd.f32 %v236, %v285
        %v335 = vadd.f32 %v237, %v286
        %v336 = vadd.f32 %v238, %v287
        %v337 = vadd.f32 %v239, %v288
        %v338 = vadd.f32 %v240, %v289
        %v339 = vadd.f32 %v241, %v290
        %v340 = vadd.f32 %v242, %v291
        %v341 = vadd.f32 %v243, %v292
        %v342 = vadd.f32 %v244, %v293
        %v343 = vadd.f32 %v245, %v294
        %v344 = vadd.f32 %v246, %v295
        %v345 = vadd.f32 %v247, %v296
        %v346 = vadd.f32 %v248, %v297
        %v347 = vadd.f32 %v249, %v298
        %v348 = vadd.f32 %v250, %v299
        %v349 = vadd.f32 %v251, %v300
        %v350 = vadd.f32 %v252, %v301
        %v351 = vadd.f32 %v253, %v302
        %352 = vst [vmem:[%s201] sm:$0xff] %v303
        %353 = vst [vmem:[%s201 + $0x8] sm:$0xff] %v304
        %354 = vst [vmem:[%s201 + $0x10] sm:$0xff] %v305
        %355 = vst [vmem:[%s201 + $0x18] sm:$0xff] %v306
        %356 = vst [vmem:[%s201 + $0x20] sm:$0xff] %v307
        %357 = vst [vmem:[%s201 + $0x28] sm:$0xff] %v308
        %358 = vst [vmem:[%s201 + $0x30] sm:$0xff] %v309
        %359 = vst [vmem:[%s201 + $0x38] sm:$0xff] %v310
        %360 = vst [vmem:[%s201 + $0x40] sm:$0xff] %v311
        %361 = vst [vmem:[%s201 + $0x48] sm:$0xff] %v312
        %362 = vst [vmem:[%s201 + $0x50] sm:$0xff] %v313
        %363 = vst [vmem:[%s201 + $0x58] sm:$0xff] %v314
        %364 = vst [vmem:[%s201 + $0x60] sm:$0xff] %v315
        %365 = vst [vmem:[%s201 + $0x68] sm:$0xff] %v316
        %366 = vst [vmem:[%s201 + $0x70] sm:$0xff] %v317
        %367 = vst [vmem:[%s201 + $0x78] sm:$0xff] %v318
        %368 = vst [vmem:[%s201 + $0x80] sm:$0xff] %v319
        %369 = vst [vmem:[%s201 + $0x88] sm:$0xff] %v320
        %370 = vst [vmem:[%s201 + $0x90] sm:$0xff] %v321
        %371 = vst [vmem:[%s201 + $0x98] sm:$0xff] %v322
        %372 = vst [vmem:[%s201 + $0xa0] sm:$0xff] %v323
        %373 = vst [vmem:[%s201 + $0xa8] sm:$0xff] %v324
        %374 = vst [vmem:[%s201 + $0xb0] sm:$0xff] %v325
        %375 = vst [vmem:[%s201 + $0xb8] sm:$0xff] %v326
        %376 = vst [vmem:[%s201 + $0xc0] sm:$0xff] %v327
        %377 = vst [vmem:[%s201 + $0xc8] sm:$0xff] %v328
        %378 = vst [vmem:[%s201 + $0xd0] sm:$0xff] %v329
        %379 = vst [vmem:[%s201 + $0xd8] sm:$0xff] %v330
        %380 = vst [vmem:[%s201 + $0xe0] sm:$0xff] %v331
        %381 = vst [vmem:[%s201 + $0xe8] sm:$0xff] %v332
        %382 = vst [vmem:[%s201 + $0xf0] sm:$0xff] %v333
        %383 = vst [vmem:[%s201 + $0xf8] sm:$0xff] %v334
        %384 = vst [vmem:[%s201 + $0x100] sm:$0xff] %v335
        %385 = vst [vmem:[%s201 + $0x108] sm:$0xff] %v336
        %386 = vst [vmem:[%s201 + $0x110] sm:$0xff] %v337
        %387 = vst [vmem:[%s201 + $0x118] sm:$0xff] %v338
        %388 = vst [vmem:[%s201 + $0x120] sm:$0xff] %v339
        %389 = vst [vmem:[%s201 + $0x128] sm:$0xff] %v340
        %390 = vst [vmem:[%s201 + $0x130] sm:$0xff] %v341
        %391 = vst [vmem:[%s201 + $0x138] sm:$0xff] %v342
        %392 = vst [vmem:[%s201 + $0x140] sm:$0xff] %v343
        %393 = vst [vmem:[%s201 + $0x148] sm:$0xff] %v344
        %394 = vst [vmem:[%s201 + $0x150] sm:$0xff] %v345
        %395 = vst [vmem:[%s201 + $0x158] sm:$0xff] %v346
        %396 = vst [vmem:[%s201 + $0x160] sm:$0xff] %v347
        %397 = vst [vmem:[%s201 + $0x168] sm:$0xff] %v348
        %398 = vst [vmem:[%s201 + $0x170] sm:$0xff] %v349
        %399 = vst [vmem:[%s201 + $0x178] sm:$0xff] %v350
        %400 = vst [vmem:[%s201 + $0x180] sm:$0xff] %v351
        %s401 = sand.u32 %s82, 1
        %s402 = scalar_lea.sflag [#allocation4], %s401
        %s403 = sand.u32 %s82, 1
        %s404 = smul.addr %s403, 392
        %s405 = scalar_lea.vmem [#allocation7], %s404
        // Predicated region
        $region37: #{tpu_custom_call.1} parent=27 // pred_check
          %p406 = pneg %p92
        $region38: #{tpu_custom_call.1} parent=27 // pred_check_branch
          %408 = sbr.rel (%p406) target = $region40
        $region39: #{tpu_custom_call.1} parent=27 // pred_region
          %s409 = smul.u32 49, %s22
          %s411 = ssub.s32 6272, 6272
          %412 = vsyncadd %s402, %s411
          %s413 = smul.addr %s409, 128
          %s414 = scalar_lea.hbm %s2, %s413
          %s415 = sshll.u32 %s405, 4
          %s416 = int_to_ptr.vmem [resolvable:$true] %s415
          %421 = dma.vmem_to_hbm [thread:$0]  %s416, 6272, %s414, %s402, 128, 128, 8
        $region40: #{tpu_custom_call.1} parent=27 // pred_fallthru
          _
      $region28: #{tpu_custom_call.1} parent=5 // pred_fallthru
        _
      %p422 = scmp.le.s32.totalorder 2, %s17
      // Predicated region
      $region41: #{tpu_custom_call.1} parent=5 // pred_check
        %p423 = pneg %p422
      $region42: #{tpu_custom_call.1} parent=5 // pred_check_branch
        %425 = sbr.rel (%p423) target = $region44
      $region43: #{tpu_custom_call.1} parent=5 // pred_region
        %s426 = ssub.s32 %s17, 2
        // Predicated region
        $region45: #{tpu_custom_call.1} parent=43 // pred_check
          %p427 = pneg %p98
        $region46: #{tpu_custom_call.1} parent=43 // pred_check_branch
          %429 = sbr.rel (%p427) target = $region48
        $region47: #{tpu_custom_call.1} parent=43 // pred_region
          %s430 = sand.u32 %s83, 1
          %s431 = scalar_lea.sflag [#allocation4], %s430
          %s432 = sand.u32 %s83, 1
          %s433 = smul.addr %s432, 392
          %s434 = scalar_lea.vmem [#allocation7], %s433
          %435 = dma.done %s431, 6272
        $region48: #{tpu_custom_call.1} parent=43 // pred_fallthru
          _
      $region44: #{tpu_custom_call.1} parent=5 // pred_fallthru
        _
    $region6: #{tpu_custom_call.1} parent=1 // loop_footer
      %s21 = sadd.s32 1, %s17
    $region7: #{tpu_custom_call.1} parent=1 // loop_footer_branch
      %16 = sbr.rel target = $region3
    $region8: #{tpu_custom_call.1} parent=1 // loop_exit
      _
    %436 = vsyncpa [#allocation3], 1
    %s437 = scalar_lea.sflag [#allocation3], 1
    %438 = vsyncpa %s437, 1
    %439 = vsyncpa [#allocation6], 1
    %s440 = scalar_lea.sflag [#allocation6], 1
    %441 = vsyncpa %s440, 1
    %442 = vsyncpa [#allocation4], 1
    %s443 = scalar_lea.sflag [#allocation4], 1
    %444 = vsyncpa %s443, 1

</llo_original>
